<compile_context>
chip_gen: v7x
topology: tpu7x:2x2x1
jax: 0.10.0
libtpu: 0.0.40
codegen_flags: <defaults>
</compile_context>

<pallas_src>
import functools

import jax
import jax.numpy as jnp
import numpy as np
from jax.experimental import pallas as pl
from jax.experimental.pallas import tpu as pltpu


def _round_up(x: int, m: int) -> int:
    return ((x + m - 1) // m) * m


def bmf_kernel(idx_ref, iota_ref, tab_ref, out_ref, *, r: int, matmul_dtype):
    """One batch-tile of the biased-MF forward pass (batch on the lane axis).

    idx_ref  : (2, TB) int32        row 0 = user ids, row 1 = item ids + n_users
    iota_ref : (n_total_pad, 1) i32 precomputed row-index column (VMEM, whole)
    tab_ref  : (2R, n_total_pad)    fused block-diagonal table (VMEM, whole)
    out_ref  : (1, TB) f32          predicted ratings (lane-dense row)
    """
    iota = iota_ref[...]                                   # (n_total_pad, 1)
    # Two-hot selection matrix: 1 at row user[b] and at row n_users+item[b].
    # 0/1 is exact in bf16, so matmul_dtype only affects table precision.
    two_hot = ((iota == idx_ref[0:1, :]) |
               (iota == idx_ref[1:2, :])).astype(matmul_dtype)   # (n_total_pad, TB)

    # Single fused MXU matmul: block-diagonal table @ two-hot -> (2R, TB) f32.
    res = jnp.dot(tab_ref[...], two_hot, preferred_element_type=jnp.float32)

    u_rows = res[0:r, :]           # user block  (sublane-tile-aligned slice)
    i_rows = res[r:2 * r, :]       # item block

    # sum_f U'[f]*I'[f] = uf.if + user_intercept + item_intercept(+g); padded
    # rows are zero on both sides, so summing all R rows is exact.
    out_ref[...] = jnp.sum(u_rows * i_rows, axis=0, keepdims=True)   # (1, TB)


def biased_mf_forward(user, item, user_factors, item_factors,
                      user_intercepts, item_intercepts, global_intercept,
                      *, use_global_intercept=True, tile_b=2048,
                      matmul_dtype=jnp.bfloat16):
    """Biased-MF forward. Returns (B,) f32 predictions (matches pred.squeeze())."""
    B = user.shape[0]
    n_users, F = user_factors.shape
    n_items, _ = item_factors.shape
    n_total = n_users + n_items
    n_total_pad = _round_up(n_total, 8)
    R = max(8, _round_up(F + 2, 8))            # sublane rows per block

    g = jnp.asarray(global_intercept, jnp.float32).reshape(1, 1)
    item_int_eff = item_intercepts.astype(jnp.float32)
    if use_global_intercept:
        # Fold the global intercept into the item-intercept column (drops the
        # SMEM operand and the per-tile scalar add).
        item_int_eff = item_int_eff + g

    # Fused, block-diagonal, transposed table -- built ONCE in the wrapper.
    #   user column u : [factor_0..factor_{F-1}, user_intercept, 1, 0-pad]
    #   item column i : [factor_0..factor_{F-1}, 1, item_intercept(+g), 0-pad]
    ones_u = jnp.ones((n_users, 1), jnp.float32)
    ones_i = jnp.ones((n_items, 1), jnp.float32)
    u_cols = jnp.concatenate(
        [user_factors.astype(jnp.float32), user_intercepts.astype(jnp.float32),
         ones_u], axis=1)                                       # (n_users, F+2)
    i_cols = jnp.concatenate(
        [item_factors.astype(jnp.float32), ones_i, item_int_eff], axis=1)
    tab = jnp.zeros((2 * R, n_total_pad), jnp.float32)
    tab = tab.at[0:(F + 2), 0:n_users].set(u_cols.T)
    tab = tab.at[R:R + F + 2, n_users:n_total].set(i_cols.T)
    tab = tab.astype(matmul_dtype)                              # (2R, n_total_pad)

    # Precomputed row-index column (hoists the per-tile iota generation).
    iota_col = jnp.arange(n_total_pad, dtype=jnp.int32).reshape(n_total_pad, 1)

    # Batch tiling: lane-dense, padded, and megacore-aware (keep >= 2 grid
    # steps on v7x whenever the batch allows it).
    tile_eff = min(int(tile_b), _round_up(pl.cdiv(B, 2), 512))
    tile_eff = max(tile_eff, 512)
    n_tiles = pl.cdiv(B, tile_eff)
    b_pad = n_tiles * tile_eff

    # Packed indices: row 0 user ids, row 1 item ids offset by n_users.
    # Padded lanes use (user 0, item 0); their (discarded) prediction is valid.
    idx = jnp.concatenate(
        [jnp.zeros((1, b_pad), jnp.int32).at[0, :B].set(user.astype(jnp.int32)),
         jnp.full((1, b_pad), n_users, jnp.int32)
            .at[0, :B].set(item.astype(jnp.int32) + n_users)],
        axis=0)                                                  # (2, b_pad)

    # Explicit VMEM budget (v5e default scoped VMEM is only 16 MiB).
    dt_size = jnp.dtype(matmul_dtype).itemsize
    est = (2 * R * n_total_pad * dt_size                 # fused table
           + n_total_pad * 128 * 4                       # iota column (lane pad)
           + 2 * (2 * tile_eff * 4 + 8 * tile_eff * 4)   # dbl-buffered idx/out
           + 2 * (n_total_pad * tile_eff * dt_size       # two-hot intermediate
                  + 2 * R * tile_eff * 4))               # matmul result
    vmem_limit = int(min(max(4 * est, 16 * 2 ** 20), 32 * 2 ** 20))

    kernel = functools.partial(bmf_kernel, r=R, matmul_dtype=matmul_dtype)

    out = pl.pallas_call(
        kernel,
        out_shape=jax.ShapeDtypeStruct((1, b_pad), jnp.float32),
        grid_spec=pltpu.PrefetchScalarGridSpec(
            num_scalar_prefetch=0,
            grid=(n_tiles,),
            in_specs=[
                # packed index rows, tiled along the batch/lane axis
                pl.BlockSpec((2, tile_eff), lambda i: (0, i)),
                # grid-invariant whole-array VMEM residents (single copy,
                # no per-step double buffering)
                pl.BlockSpec(memory_space=pltpu.MemorySpace.VMEM),   # iota
                pl.BlockSpec(memory_space=pltpu.MemorySpace.VMEM),   # table
            ],
            out_specs=pl.BlockSpec((1, tile_eff), lambda i: (0, i)),
        ),
        compiler_params=pltpu.CompilerParams(
            dimension_semantics=("parallel",),
            vmem_limit_bytes=vmem_limit),
    )(idx, iota_col, tab)

    return out[0, :B]                                   # matches pred.squeeze()


def xavier_uniform(key, shape):
    """torch.nn.init.xavier_uniform_ for a 2-D (fan_out, fan_in) weight."""
    fan_out, fan_in = shape
    bound = float(np.sqrt(6.0 / (fan_in + fan_out)))
    return jax.random.uniform(key, shape, jnp.float32, -bound, bound)


def _reference(user, item, uf, itf, ub, ib, g, use_global_intercept):
    ref = (ub[user, 0] + ib[item, 0]
           + jnp.sum(uf[user] * itf[item], axis=1))
    if use_global_intercept:
        ref = ref + g[0, 0]
    return ref


if __name__ == "__main__":
    # Model hyper-params (small, consistent with the module's __init__).
    n_users, n_items, n_factors = 64, 48, 1
    B = 1000  # NOT a multiple of the tile -> exercises padding + 2-tile grid

    key = jax.random.PRNGKey(0)
    k_uf, k_if, k_u, k_i, k_ub, k_ib, k_g = jax.random.split(key, 7)

    # Module-faithful init: xavier factors, zero intercepts.
    user_factors = xavier_uniform(k_uf, (n_users, n_factors))
    item_factors = xavier_uniform(k_if, (n_items, n_factors))
    user_intercepts = jnp.zeros((n_users, 1), jnp.float32)
    item_intercepts = jnp.zeros((n_items, 1), jnp.float32)
    global_intercept = jnp.zeros((1, 1), jnp.float32)

    user = jax.random.randint(k_u, (B,), 0, n_users, dtype=jnp.int32)
    item = jax.random.randint(k_i, (B,), 0, n_items, dtype=jnp.int32)

    # 1) f32 MXU-input path (exact lookup), module-faithful parameters.
    out = biased_mf_forward(user, item, user_factors, item_factors,
                            user_intercepts, item_intercepts, global_intercept,
                            use_global_intercept=True,
                            matmul_dtype=jnp.float32)
    out = jax.block_until_ready(out)
    ref = _reference(user, item, user_factors, item_factors,
                     user_intercepts, item_intercepts, global_intercept, True)
    np.testing.assert_allclose(np.asarray(out), np.asarray(ref),
                               rtol=1e-5, atol=1e-5)

    # 2) f32 path with non-zero intercepts (validates the fused block-diagonal
    #    table + folded global intercept).
    ub2 = 0.1 * jax.random.normal(k_ub, (n_users, 1), jnp.float32)
    ib2 = 0.1 * jax.random.normal(k_ib, (n_items, 1), jnp.float32)
    g2 = 0.1 * jax.random.normal(k_g, (1, 1), jnp.float32)
    out2 = biased_mf_forward(user, item, user_factors, item_factors,
                             ub2, ib2, g2, use_global_intercept=True,
                             matmul_dtype=jnp.float32)
    out2 = jax.block_until_ready(out2)
    ref2 = _reference(user, item, user_factors, item_factors, ub2, ib2, g2, True)
    np.testing.assert_allclose(np.asarray(out2), np.asarray(ref2),
                               rtol=1e-5, atol=1e-5)

    # 3) use_global_intercept=False branch (no fold), f32.
    out3 = biased_mf_forward(user, item, user_factors, item_factors,
                             ub2, ib2, g2, use_global_intercept=False,
                             matmul_dtype=jnp.float32)
    out3 = jax.block_until_ready(out3)
    ref3 = _reference(user, item, user_factors, item_factors, ub2, ib2, g2, False)
    np.testing.assert_allclose(np.asarray(out3), np.asarray(ref3),
                               rtol=1e-5, atol=1e-5)

    # 4) Default bf16 MXU-input fast path (v5e/v6e/v7x native MXU dtype);
    #    looser tolerance since table values are rounded to bf16 pre-matmul.
    out4 = biased_mf_forward(user, item, user_factors, item_factors,
                             ub2, ib2, g2, use_global_intercept=True)
    out4 = jax.block_until_ready(out4)
    np.testing.assert_allclose(np.asarray(out4), np.asarray(ref2),
                               rtol=2e-2, atol=5e-3)

    print("KERNEL_OK")
</pallas_src>

<mosaic_0001>
module attributes {stable_mosaic.version = 11 : i64} {
  func.func @bmf_kernel(%arg0: i32, %arg1: memref<2x512xi32, #tpu.memory_space<vmem>>, %arg2: memref<112x1xi32, #tpu.memory_space<vmem>>, %arg3: memref<16x112xf32, #tpu.memory_space<vmem>>, %arg4: memref<1x512xf32, #tpu.memory_space<vmem>>) attributes {dimension_semantics = [#tpu.dimension_semantics<parallel>], iteration_bounds = array<i64: 2>, scalar_prefetch = 0 : i64, scratch_operands = 0 : i64, tpu.core_type = #tpu.core_type<tc>, window_params = [{transform_indices = @transform_0, window_bounds = array<i64: 2, 512>}, {pipeline_mode = #tpu.pipeline_mode<synchronous>, transform_indices = @transform_1, window_bounds = array<i64: 112, 1>}, {pipeline_mode = #tpu.pipeline_mode<synchronous>, transform_indices = @transform_2, window_bounds = array<i64: 16, 112>}, {transform_indices = @transform_3, window_bounds = array<i64: 1, 512>}]} {
    %c0 = arith.constant 0 : index
    %c0_0 = arith.constant 0 : index
    %0 = vector.load %arg2[%c0, %c0_0] : memref<112x1xi32, #tpu.memory_space<vmem>>, vector<112x1xi32>
    %c0_1 = arith.constant 0 : index
    %c0_2 = arith.constant 0 : index
    %1 = vector.load %arg1[%c0_1, %c0_2] : memref<2x512xi32, #tpu.memory_space<vmem>>, vector<1x512xi32>
    %2 = vector.broadcast %0 : vector<112x1xi32> to vector<112x512xi32>
    %3 = vector.broadcast %1 : vector<1x512xi32> to vector<112x512xi32>
    %4 = arith.cmpi eq, %2, %3 : vector<112x512xi32>
    %c1 = arith.constant 1 : index
    %c0_3 = arith.constant 0 : index
    %5 = vector.load %arg1[%c1, %c0_3] : memref<2x512xi32, #tpu.memory_space<vmem>>, vector<1x512xi32>
    %6 = vector.broadcast %0 : vector<112x1xi32> to vector<112x512xi32>
    %7 = vector.broadcast %5 : vector<1x512xi32> to vector<112x512xi32>
    %8 = arith.cmpi eq, %6, %7 : vector<112x512xi32>
    %9 = arith.ori %4, %8 : vector<112x512xi1>
    %10 = arith.extui %9 : vector<112x512xi1> to vector<112x512xi32>
    %11 = arith.sitofp %10 : vector<112x512xi32> to vector<112x512xf32>
    %c0_4 = arith.constant 0 : index
    %c0_5 = arith.constant 0 : index
    %12 = vector.load %arg3[%c0_4, %c0_5] : memref<16x112xf32, #tpu.memory_space<vmem>>, vector<16x112xf32>
    %cst = arith.constant dense<0.000000e+00> : vector<16x512xf32>
    %13 = tpu.matmul %12, %11, %cst {dimension_numbers = #tpu.dot_dimension_numbers<[1], [0], [0], [1], [0, 0, 1, 1], [], []>} : vector<16x112xf32>, vector<112x512xf32>, vector<16x512xf32> -> vector<16x512xf32>
    %14 = vector.extract_strided_slice %13 {offsets = [0, 0], sizes = [8, 512], strides = [1, 1]} : vector<16x512xf32> to vector<8x512xf32>
    %15 = vector.extract_strided_slice %13 {offsets = [8, 0], sizes = [8, 512], strides = [1, 1]} : vector<16x512xf32> to vector<8x512xf32>
    %16 = arith.mulf %14, %15 : vector<8x512xf32>
    %cst_6 = arith.constant dense<0.000000e+00> : vector<512xf32>
    %17 = vector.multi_reduction <add>, %16, %cst_6 [0] : vector<8x512xf32> to vector<512xf32>
    %18 = vector.shape_cast %17 : vector<512xf32> to vector<1x512xf32>
    %c0_7 = arith.constant 0 : index
    %c0_8 = arith.constant 0 : index
    %19 = vector.load %arg4[%c0_7, %c0_8] : memref<1x512xf32, #tpu.memory_space<vmem>>, vector<1x512xf32>
    tpu.vector_store %arg4[%c0_7, %c0_8], %18 {strides = array<i32>} : memref<1x512xf32, #tpu.memory_space<vmem>>, vector<1x512xf32>,
    return
  }
  func.func @transform_0(%arg0: i32) -> (i32, i32) {
    %c0_i32 = arith.constant 0 : i32
    %c0_i32_0 = arith.constant 0 : i32
    return %c0_i32, %arg0 : i32, i32
  }
  func.func @transform_1(%arg0: i32) -> (i32, i32) {
    %c0_i32 = arith.constant 0 : i32
    %c0_i32_0 = arith.constant 0 : i32
    %c0_i32_1 = arith.constant 0 : i32
    return %c0_i32, %c0_i32_0 : i32, i32
  }
  func.func @transform_2(%arg0: i32) -> (i32, i32) {
    %c0_i32 = arith.constant 0 : i32
    %c0_i32_0 = arith.constant 0 : i32
    %c0_i32_1 = arith.constant 0 : i32
    return %c0_i32, %c0_i32_0 : i32, i32
  }
  func.func @transform_3(%arg0: i32) -> (i32, i32) {
    %c0_i32 = arith.constant 0 : i32
    %c0_i32_0 = arith.constant 0 : i32
    return %c0_i32, %arg0 : i32, i32
  }
}

</mosaic_0001>

<llo_original>
// kernel: tpu_custom_call.1
$region0: #{tpu_custom_call.1}
  #allocation0 [shape = 'u32[]', space=smem, size = 0x4, offset = 0x4, fixed_abs, tag = 'smem constant byte address 0x4 - core index']
  #allocation1 [shape = 'u32[144,128]{1,0:T(1,128)}', space=vmem, size = 0x12000, scoped, tag = 'internal scratch']
  %s0 = inlined_call_operand.vmem [shape: s32[2,1024], index: 0, kind: input, shape index: {}]
  %s1 = inlined_call_operand.vmem [shape: s32[112,1], index: 1, kind: input, shape index: {}]
  %s2 = inlined_call_operand.vmem [shape: f32[16,112], index: 2, kind: input, shape index: {}]
  %s3 = inlined_call_operand.hbm [shape: f32[1,1024], index: 3, kind: output, shape index: {}]
  %s4 = sld [smem:[#allocation0]]
  $region45: #{tpu_custom_call.1} parent=0
    _
  %s6 = ssub.s32 1, %s4
  %s7 = scalar_select 0, %s6, %s4
  $region1: #{tpu_custom_call.1} parent=0
    #allocation2 [shape = 'u8[4096]{0}', space=vmem, size = 0x1000, scoped, tag = 'output window, operand 0']
    #allocation3 [shape = 's32[2]{0}', space=sflag, size = 0x8, scoped, tag = 'scoped memory for tpu_custom_call.1']
    %8 = vsyncpa [#allocation3], 0
    %s9 = scalar_lea.sflag [#allocation3], 1
    %10 = vsyncpa %s9, 0
    loop: start=0, step=1, limit=4
    $region2: #{tpu_custom_call.1} parent=1 // loop_pre_header
      _
    $region3: #{tpu_custom_call.1} parent=1 // loop_header
      %s12 = sphi 0, %s16
      %p13 = scmp.ge.s32.totalorder %s12, 4
      %s22 = sphi 0, %s24
      %s25 = sphi 0, %s22
      %s26 = sphi 0, %s25
      %s42 = sphi 0, %s26
      %s46 = sphi 0, %s46
      %s48 = sphi 0, %s46
      %s49 = sphi 0, %s48
      %s63 = sphi 0, %s49
      %s67 = sphi 0, %s67
      %s69 = sphi 0, %s67
      %s70 = sphi 0, %s69
      %s84 = sphi 0, %s70
      %s90 = sphi 0, %s92
      %s93 = sphi 0, %s90
      %s94 = sphi 0, %s93
      %s110 = sphi 0, %s94
    $region4: #{tpu_custom_call.1} parent=1 // loop_header_branch
      %15 = sbr.rel (%p13) target = $region8
    $region5: #{tpu_custom_call.1} parent=1 // loop_body
      %s17 = ssub.s32 %s12, 1
      %s18 = ssub.s32 %s12, 2
      %s19 = sadd.s32 %s12, 1
      %s20 = ssub.s32 %s12, %s19
      %p21 = scmp.eq.s32.totalorder %s20, 0
      %s23 = sadd.s32 %s22, 1
      %s24 = scalar_select %p21, %s22, %s23
      %p27 = pneg %p21
      %p28 = scmp.eq.s32.totalorder %s12, 1
      %p29 = por %p27, %p28
      %p30 = scmp.ne.s32.totalorder %s22, %s25
      %p31 = scmp.eq.s32.totalorder %s12, 0
      %p32 = por %p30, %p31
      %p33 = scmp.ne.s32.totalorder %s22, %s25
      %p34 = scmp.eq.s32.totalorder %s17, 1
      %p35 = por %p33, %p34
      %p36 = scmp.ne.s32.totalorder %s25, %s26
      %p37 = scmp.eq.s32.totalorder %s17, 0
      %p38 = por %p36, %p37
      %p39 = scmp.ne.s32.totalorder %s25, %s26
      %p40 = scmp.eq.s32.totalorder %s18, 1
      %p41 = por %p39, %p40
      %p43 = scmp.ne.s32.totalorder %s26, %s42
      %p44 = scmp.eq.s32.totalorder %s18, 0
      %p45 = por %p43, %p44
      %s47 = sadd.s32 %s46, 1
      %p50 = scmp.eq.s32.totalorder %s12, 1
      %p51 = scmp.ne.s32.totalorder %s46, %s48
      %p52 = scmp.eq.s32.totalorder %s12, 0
      %p53 = por %p51, %p52
      %p54 = scmp.ne.s32.totalorder %s46, %s48
      %p55 = scmp.eq.s32.totalorder %s17, 1
      %p56 = por %p54, %p55
      %p57 = scmp.ne.s32.totalorder %s48, %s49
      %p58 = scmp.eq.s32.totalorder %s17, 0
      %p59 = por %p57, %p58
      %p60 = scmp.ne.s32.totalorder %s48, %s49
      %p61 = scmp.eq.s32.totalorder %s18, 1
      %p62 = por %p60, %p61
      %p64 = scmp.ne.s32.totalorder %s49, %s63
      %p65 = scmp.eq.s32.totalorder %s18, 0
      %p66 = por %p64, %p65
      %s68 = sadd.s32 %s67, 1
      %p71 = scmp.eq.s32.totalorder %s12, 1
      %p72 = scmp.ne.s32.totalorder %s67, %s69
      %p73 = scmp.eq.s32.totalorder %s12, 0
      %p74 = por %p72, %p73
      %p75 = scmp.ne.s32.totalorder %s67, %s69
      %p76 = scmp.eq.s32.totalorder %s17, 1
      %p77 = por %p75, %p76
      %p78 = scmp.ne.s32.totalorder %s69, %s70
      %p79 = scmp.eq.s32.totalorder %s17, 0
      %p80 = por %p78, %p79
      %p81 = scmp.ne.s32.totalorder %s69, %s70
      %p82 = scmp.eq.s32.totalorder %s18, 1
      %p83 = por %p81, %p82
      %p85 = scmp.ne.s32.totalorder %s70, %s84
      %p86 = scmp.eq.s32.totalorder %s18, 0
      %p87 = por %p85, %p86
      %s88 = ssub.s32 %s12, %s19
      %p89 = scmp.eq.s32.totalorder %s88, 0
      %s91 = sadd.s32 %s90, 1
      %s92 = scalar_select %p89, %s90, %s91
      %p95 = pneg %p89
      %p96 = scmp.eq.s32.totalorder %s12, 1
      %p97 = por %p95, %p96
      %p98 = scmp.ne.s32.totalorder %s90, %s93
      %p99 = scmp.eq.s32.totalorder %s12, 0
      %p100 = por %p98, %p99
      %p101 = scmp.ne.s32.totalorder %s90, %s93
      %p102 = scmp.eq.s32.totalorder %s17, 1
      %p103 = por %p101, %p102
      %p104 = scmp.ne.s32.totalorder %s93, %s94
      %p105 = scmp.eq.s32.totalorder %s17, 0
      %p106 = por %p104, %p105
      %p107 = scmp.ne.s32.totalorder %s93, %s94
      %p108 = scmp.eq.s32.totalorder %s18, 1
      %p109 = por %p107, %p108
      %p111 = scmp.ne.s32.totalorder %s94, %s110
      %p112 = scmp.eq.s32.totalorder %s18, 0
      %p113 = por %p111, %p112
      %p114 = scmp.le.s32.totalorder 1, %s12
      %p115 = scmp.lt.s32.totalorder %s12, 3
      %p116 = pnand %p114, %p115
      %p117 = pneg %p116
      // Predicated region
      $region9: #{tpu_custom_call.1} parent=5 // pred_check
        _
      $region10: #{tpu_custom_call.1} parent=5 // pred_check_branch
        %119 = sbr.rel (%p116) target = $region12
      $region11: #{tpu_custom_call.1} parent=5 // pred_region
        %s120 = ssub.s32 %s12, 1
        // Predicated region
        $region13: #{tpu_custom_call.1} parent=11 // pred_check
          %p121 = pneg %p59
        $region14: #{tpu_custom_call.1} parent=11 // pred_check_branch
          %123 = sbr.rel (%p121) target = $region16
        $region15: #{tpu_custom_call.1} parent=11 // pred_region
          _
        $region16: #{tpu_custom_call.1} parent=11 // pred_fallthru
          _
        // Predicated region
        $region17: #{tpu_custom_call.1} parent=11 // pred_check
          %p124 = pneg %p80
        $region18: #{tpu_custom_call.1} parent=11 // pred_check_branch
          %126 = sbr.rel (%p124) target = $region20
        $region19: #{tpu_custom_call.1} parent=11 // pred_region
          _
        $region20: #{tpu_custom_call.1} parent=11 // pred_fallthru
          _
      $region12: #{tpu_custom_call.1} parent=5 // pred_fallthru
        _
      %p127 = scmp.lt.s32.totalorder %s12, 2
      // Predicated region
      $region21: #{tpu_custom_call.1} parent=5 // pred_check
        %p128 = pneg %p127
      $region22: #{tpu_custom_call.1} parent=5 // pred_check_branch
        %130 = sbr.rel (%p128) target = $region24
      $region23: #{tpu_custom_call.1} parent=5 // pred_region
        // Predicated region
        $region25: #{tpu_custom_call.1} parent=23 // pred_check
          %p131 = pneg %p32
        $region26: #{tpu_custom_call.1} parent=23 // pred_check_branch
          %133 = sbr.rel (%p131) target = $region28
        $region27: #{tpu_custom_call.1} parent=23 // pred_region
          %s134 = smul.u32 4, %s12
          %p135 = scmp.lt.s32.totalorder %s134, 7
          %s136 = scalar_select %p135, %s134, 7
          %s137 = smul.addr %s136, 2
          %s138 = scalar_lea.vmem %s0, %s137
          %s139 = smul.u32 4, %s12
        $region28: #{tpu_custom_call.1} parent=23 // pred_fallthru
          _
      $region24: #{tpu_custom_call.1} parent=5 // pred_fallthru
        _
      %p140 = scmp.le.s32.totalorder 1, %s12
      %p141 = scmp.lt.s32.totalorder %s12, 3
      %p142 = pnand %p140, %p141
      %p143 = pneg %p142
      // Predicated region
      $region29: #{tpu_custom_call.1} parent=5 // pred_check
        _
      $region30: #{tpu_custom_call.1} parent=5 // pred_check_branch
        %145 = sbr.rel (%p142) target = $region32
      $region31: #{tpu_custom_call.1} parent=5 // pred_region
        %s146 = ssub.s32 %s12, 1
        %s147 = smul.u32 4, %s17
        %p148 = scmp.lt.s32.totalorder %s147, 7
        %s149 = scalar_select %p148, %s147, 7
        %s150 = smul.addr %s149, 2
        %s151 = scalar_lea.vmem %s0, %s150
        %p152 = pneg %p38
        %p153 = pneg %p35
        %p154 = pneg %p59
        %p155 = pneg %p56
        %p156 = pneg %p80
        %p157 = pneg %p77
        %p158 = pneg %p106
        %p159 = pneg %p103
        %s160 = sand.u32 %s93, 1
        %s161 = scalar_lea.sflag [#allocation3], %s160
        %s162 = sand.u32 %s93, 1
        %s163 = smul.addr %s162, 4
        %s164 = scalar_lea.vmem [#allocation2], %s163
        %s165 = smul.u32 4, %s17
        %p166 = scmp.lt.s32.totalorder %s165, 7
        %s167 = scalar_select %p166, %s165, 7
        %s168 = smul.addr %s167, 2
        %s169 = scalar_lea.vmem %s0, %s168
        %s170 = smul.u32 4, %s17
        %s171 = smul.u32 4, %s17
        %v172 = vld [vmem:[%s1] sm:$0xff]
        %v173 = vld [vmem:[%s1 + $0x8] sm:$0xff]
        %v174 = vld [vmem:[%s1 + $0x10] sm:$0xff]
        %v175 = vld [vmem:[%s1 + $0x18] sm:$0xff]
        %v176 = vld [vmem:[%s1 + $0x20] sm:$0xff]
        %v177 = vld [vmem:[%s1 + $0x28] sm:$0xff]
        %v178 = vld [vmem:[%s1 + $0x30] sm:$0xff]
        %v179 = vld [vmem:[%s1 + $0x38] sm:$0xff]
        %v180 = vld [vmem:[%s1 + $0x40] sm:$0xff]
        %v181 = vld [vmem:[%s1 + $0x48] sm:$0xff]
        %v182 = vld [vmem:[%s1 + $0x50] sm:$0xff]
        %v183 = vld [vmem:[%s1 + $0x58] sm:$0xff]
        %v184 = vld [vmem:[%s1 + $0x60] sm:$0xff]
        %v185 = vld [vmem:[%s1 + $0x68] sm:$0xff]
        %v186 = vld [vmem:[%s169] ss:$2 sm:$0xf]
        %187 = vset.pattern.permute.xlu0 0
        %188 = vperm.xlu0 %187, %v172
        %v189 = vpop.permute.xlu0 %188
        %190 = vset.pattern.permute.xlu0 0
        %191 = vperm.xlu0 %190, %v173
        %v192 = vpop.permute.xlu0 %191
        %193 = vset.pattern.permute.xlu0 0
        %194 = vperm.xlu0 %193, %v174
        %v195 = vpop.permute.xlu0 %194
        %196 = vset.pattern.permute.xlu0 0
        %197 = vperm.xlu0 %196, %v175
        %v198 = vpop.permute.xlu0 %197
        %199 = vset.pattern.permute.xlu0 0
        %200 = vperm.xlu0 %199, %v176
        %v201 = vpop.permute.xlu0 %200
        %202 = vset.pattern.permute.xlu0 0
        %203 = vperm.xlu0 %202, %v177
        %v204 = vpop.permute.xlu0 %203
        %205 = vset.pattern.permute.xlu0 0
        %206 = vperm.xlu0 %205, %v178
        %v207 = vpop.permute.xlu0 %206
        %208 = vset.pattern.permute.xlu0 0
        %209 = vperm.xlu0 %208, %v179
        %v210 = vpop.permute.xlu0 %209
        %211 = vset.pattern.permute.xlu0 0
        %212 = vperm.xlu0 %211, %v180
        %v213 = vpop.permute.xlu0 %212
        %214 = vset.pattern.permute.xlu0 0
        %215 = vperm.xlu0 %214, %v181
        %v216 = vpop.permute.xlu0 %215
        %217 = vset.pattern.permute.xlu0 0
        %218 = vperm.xlu0 %217, %v182
        %v219 = vpop.permute.xlu0 %218
        %220 = vset.pattern.permute.xlu0 0
        %221 = vperm.xlu0 %220, %v183
        %v222 = vpop.permute.xlu0 %221
        %223 = vset.pattern.permute.xlu0 0
        %224 = vperm.xlu0 %223, %v184
        %v225 = vpop.permute.xlu0 %224
        %226 = vset.pattern.permute.xlu0 0
        %227 = vperm.xlu0 %226, %v185
        %v228 = vpop.permute.xlu0 %227
        %v229 = vlaneseq
        %v230 = vshrl.u32 %v229, 7
        %v231 = vsub.s32 0, %v230
        %v232 = vrot.slane %v186, %v231
        %v233 = vlaneseq
        %v234 = vshrl.u32 %v233, 7
        %v235 = vsub.s32 1, %v234
        %v236 = vrot.slane %v186, %v235
        %v237 = vlaneseq
        %v238 = vshrl.u32 %v237, 7
        %v239 = vsub.s32 2, %v238
        %v240 = vrot.slane %v186, %v239
        %v241 = vlaneseq
        %v242 = vshrl.u32 %v241, 7
        %v243 = vsub.s32 3, %v242
        %v244 = vrot.slane %v186, %v243
        %vm245 = vcmp.eq.s32.totalorder %v189, %v232
        %vm246 = vcmp.eq.s32.totalorder %v189, %v236
        %vm247 = vcmp.eq.s32.totalorder %v189, %v240
        %vm248 = vcmp.eq.s32.totalorder %v189, %v244
        %vm249 = vcmp.eq.s32.totalorder %v192, %v232
        %vm250 = vcmp.eq.s32.totalorder %v192, %v236
        %vm251 = vcmp.eq.s32.totalorder %v192, %v240
        %vm252 = vcmp.eq.s32.totalorder %v192, %v244
        %vm253 = vcmp.eq.s32.totalorder %v195, %v232
        %vm254 = vcmp.eq.s32.totalorder %v195, %v236
        %vm255 = vcmp.eq.s32.totalorder %v195, %v240
        %vm256 = vcmp.eq.s32.totalorder %v195, %v244
        %vm257 = vcmp.eq.s32.totalorder %v198, %v232
        %vm258 = vcmp.eq.s32.totalorder %v198, %v236
        %vm259 = vcmp.eq.s32.totalorder %v198, %v240
        %vm260 = vcmp.eq.s32.totalorder %v198, %v244
        %vm261 = vcmp.eq.s32.totalorder %v201, %v232
        %vm262 = vcmp.eq.s32.totalorder %v201, %v236
        %vm263 = vcmp.eq.s32.totalorder %v201, %v240
        %vm264 = vcmp.eq.s32.totalorder %v201, %v244
        %vm265 = vcmp.eq.s32.totalorder %v204, %v232
        %vm266 = vcmp.eq.s32.totalorder %v204, %v236
        %vm267 = vcmp.eq.s32.totalorder %v204, %v240
        %vm268 = vcmp.eq.s32.totalorder %v204, %v244
        %vm269 = vcmp.eq.s32.totalorder %v207, %v232
        %vm270 = vcmp.eq.s32.totalorder %v207, %v236
        %vm271 = vcmp.eq.s32.totalorder %v207, %v240
        %vm272 = vcmp.eq.s32.totalorder %v207, %v244
        %vm273 = vcmp.eq.s32.totalorder %v210, %v232
        %vm274 = vcmp.eq.s32.totalorder %v210, %v236
        %vm275 = vcmp.eq.s32.totalorder %v210, %v240
        %vm276 = vcmp.eq.s32.totalorder %v210, %v244
        %vm277 = vcmp.eq.s32.totalorder %v213, %v232
        %vm278 = vcmp.eq.s32.totalorder %v213, %v236
        %vm279 = vcmp.eq.s32.totalorder %v213, %v240
        %vm280 = vcmp.eq.s32.totalorder %v213, %v244
        %vm281 = vcmp.eq.s32.totalorder %v216, %v232
        %vm282 = vcmp.eq.s32.totalorder %v216, %v236
        %vm283 = vcmp.eq.s32.totalorder %v216, %v240
        %vm284 = vcmp.eq.s32.totalorder %v216, %v244
        %vm285 = vcmp.eq.s32.totalorder %v219, %v232
        %vm286 = vcmp.eq.s32.totalorder %v219, %v236
        %vm287 = vcmp.eq.s32.totalorder %v219, %v240
        %vm288 = vcmp.eq.s32.totalorder %v219, %v244
        %vm289 = vcmp.eq.s32.totalorder %v222, %v232
        %vm290 = vcmp.eq.s32.totalorder %v222, %v236
        %vm291 = vcmp.eq.s32.totalorder %v222, %v240
        %vm292 = vcmp.eq.s32.totalorder %v222, %v244
        %vm293 = vcmp.eq.s32.totalorder %v225, %v232
        %vm294 = vcmp.eq.s32.totalorder %v225, %v236
        %vm295 = vcmp.eq.s32.totalorder %v225, %v240
        %vm296 = vcmp.eq.s32.totalorder %v225, %v244
        %vm297 = vcmp.eq.s32.totalorder %v228, %v232
        %vm298 = vcmp.eq.s32.totalorder %v228, %v236
        %vm299 = vcmp.eq.s32.totalorder %v228, %v240
        %vm300 = vcmp.eq.s32.totalorder %v228, %v244
        %s301 = scalar_lea.vmem %s169, 1
        %v302 = vld [vmem:[%s301] ss:$2 sm:$0xf]
        %v303 = vlaneseq
        %v304 = vshrl.u32 %v303, 7
        %v305 = vsub.s32 0, %v304
        %v306 = vrot.slane %v302, %v305
        %v307 = vlaneseq
        %v308 = vshrl.u32 %v307, 7
        %v309 = vsub.s32 1, %v308
        %v310 = vrot.slane %v302, %v309
        %v311 = vlaneseq
        %v312 = vshrl.u32 %v311, 7
        %v313 = vsub.s32 2, %v312
        %v314 = vrot.slane %v302, %v313
        %v315 = vlaneseq
        %v316 = vshrl.u32 %v315, 7
        %v317 = vsub.s32 3, %v316
        %v318 = vrot.slane %v302, %v317
        %vm319 = vcmp.eq.s32.totalorder %v189, %v306
        %vm320 = vcmp.eq.s32.totalorder %v189, %v310
        %vm321 = vcmp.eq.s32.totalorder %v189, %v314
        %vm322 = vcmp.eq.s32.totalorder %v189, %v318
        %vm323 = vcmp.eq.s32.totalorder %v192, %v306
        %vm324 = vcmp.eq.s32.totalorder %v192, %v310
        %vm325 = vcmp.eq.s32.totalorder %v192, %v314
        %vm326 = vcmp.eq.s32.totalorder %v192, %v318
        %vm327 = vcmp.eq.s32.totalorder %v195, %v306
        %vm328 = vcmp.eq.s32.totalorder %v195, %v310
        %vm329 = vcmp.eq.s32.totalorder %v195, %v314
        %vm330 = vcmp.eq.s32.totalorder %v195, %v318
        %vm331 = vcmp.eq.s32.totalorder %v198, %v306
        %vm332 = vcmp.eq.s32.totalorder %v198, %v310
        %vm333 = vcmp.eq.s32.totalorder %v198, %v314
        %vm334 = vcmp.eq.s32.totalorder %v198, %v318
        %vm335 = vcmp.eq.s32.totalorder %v201, %v306
        %vm336 = vcmp.eq.s32.totalorder %v201, %v310
        %vm337 = vcmp.eq.s32.totalorder %v201, %v314
        %vm338 = vcmp.eq.s32.totalorder %v201, %v318
        %vm339 = vcmp.eq.s32.totalorder %v204, %v306
        %vm340 = vcmp.eq.s32.totalorder %v204, %v310
        %vm341 = vcmp.eq.s32.totalorder %v204, %v314
        %vm342 = vcmp.eq.s32.totalorder %v204, %v318
        %vm343 = vcmp.eq.s32.totalorder %v207, %v306
        %vm344 = vcmp.eq.s32.totalorder %v207, %v310
        %vm345 = vcmp.eq.s32.totalorder %v207, %v314
        %vm346 = vcmp.eq.s32.totalorder %v207, %v318
        %vm347 = vcmp.eq.s32.totalorder %v210, %v306
        %vm348 = vcmp.eq.s32.totalorder %v210, %v310
        %vm349 = vcmp.eq.s32.totalorder %v210, %v314
        %vm350 = vcmp.eq.s32.totalorder %v210, %v318
        %vm351 = vcmp.eq.s32.totalorder %v213, %v306
        %vm352 = vcmp.eq.s32.totalorder %v213, %v310
        %vm353 = vcmp.eq.s32.totalorder %v213, %v314
        %vm354 = vcmp.eq.s32.totalorder %v213, %v318
        %vm355 = vcmp.eq.s32.totalorder %v216, %v306
        %vm356 = vcmp.eq.s32.totalorder %v216, %v310
        %vm357 = vcmp.eq.s32.totalorder %v216, %v314
        %vm358 = vcmp.eq.s32.totalorder %v216, %v318
        %vm359 = vcmp.eq.s32.totalorder %v219, %v306
        %vm360 = vcmp.eq.s32.totalorder %v219, %v310
        %vm361 = vcmp.eq.s32.totalorder %v219, %v314
        %vm362 = vcmp.eq.s32.totalorder %v219, %v318
        %vm363 = vcmp.eq.s32.totalorder %v222, %v306
        %vm364 = vcmp.eq.s32.totalorder %v222, %v310
        %vm365 = vcmp.eq.s32.totalorder %v222, %v314
        %vm366 = vcmp.eq.s32.totalorder %v222, %v318
        %vm367 = vcmp.eq.s32.totalorder %v225, %v306
        %vm368 = vcmp.eq.s32.totalorder %v225, %v310
        %vm369 = vcmp.eq.s32.totalorder %v225, %v314
        %vm370 = vcmp.eq.s32.totalorder %v225, %v318
        %vm371 = vcmp.eq.s32.totalorder %v228, %v306
        %vm372 = vcmp.eq.s32.totalorder %v228, %v310
        %vm373 = vcmp.eq.s32.totalorder %v228, %v314
        %vm374 = vcmp.eq.s32.totalorder %v228, %v318
        %vm375 = vmor %vm245, %vm319
        %vm376 = vmor %vm246, %vm320
        %vm377 = vmor %vm247, %vm321
        %vm378 = vmor %vm248, %vm322
        %vm379 = vmor %vm249, %vm323
        %vm380 = vmor %vm250, %vm324
        %vm381 = vmor %vm251, %vm325
        %vm382 = vmor %vm252, %vm326
        %vm383 = vmor %vm253, %vm327
        %vm384 = vmor %vm254, %vm328
        %vm385 = vmor %vm255, %vm329
        %vm386 = vmor %vm256, %vm330
        %vm387 = vmor %vm257, %vm331
        %vm388 = vmor %vm258, %vm332
        %vm389 = vmor %vm259, %vm333
        %vm390 = vmor %vm260, %vm334
        %vm391 = vmor %vm261, %vm335
        %vm392 = vmor %vm262, %vm336
        %vm393 = vmor %vm263, %vm337
        %vm394 = vmor %vm264, %vm338
        %vm395 = vmor %vm265, %vm339
        %vm396 = vmor %vm266, %vm340
        %vm397 = vmor %vm267, %vm341
        %vm398 = vmor %vm268, %vm342
        %vm399 = vmor %vm269, %vm343
        %vm400 = vmor %vm270, %vm344
        %vm401 = vmor %vm271, %vm345
        %vm402 = vmor %vm272, %vm346
        %vm403 = vmor %vm273, %vm347
        %vm404 = vmor %vm274, %vm348
        %vm405 = vmor %vm275, %vm349
        %vm406 = vmor %vm276, %vm350
        %vm407 = vmor %vm277, %vm351
        %vm408 = vmor %vm278, %vm352
        %vm409 = vmor %vm279, %vm353
        %vm410 = vmor %vm280, %vm354
        %vm411 = vmor %vm281, %vm355
        %vm412 = vmor %vm282, %vm356
        %vm413 = vmor %vm283, %vm357
        %vm414 = vmor %vm284, %vm358
        %vm415 = vmor %vm285, %vm359
        %vm416 = vmor %vm286, %vm360
        %vm417 = vmor %vm287, %vm361
        %vm418 = vmor %vm288, %vm362
        %vm419 = vmor %vm289, %vm363
        %vm420 = vmor %vm290, %vm364
        %vm421 = vmor %vm291, %vm365
        %vm422 = vmor %vm292, %vm366
        %vm423 = vmor %vm293, %vm367
        %vm424 = vmor %vm294, %vm368
        %vm425 = vmor %vm295, %vm369
        %vm426 = vmor %vm296, %vm370
        %vm427 = vmor %vm297, %vm371
        %vm428 = vmor %vm298, %vm372
        %vm429 = vmor %vm299, %vm373
        %vm430 = vmor %vm300, %vm374
        %v431 = vsel %vm375, 1, 0
        %v432 = vsel %vm376, 1, 0
        %v433 = vsel %vm377, 1, 0
        %v434 = vsel %vm378, 1, 0
        %v435 = vsel %vm379, 1, 0
        %v436 = vsel %vm380, 1, 0
        %v437 = vsel %vm381, 1, 0
        %v438 = vsel %vm382, 1, 0
        %v439 = vsel %vm383, 1, 0
        %v440 = vsel %vm384, 1, 0
        %v441 = vsel %vm385, 1, 0
        %v442 = vsel %vm386, 1, 0
        %v443 = vsel %vm387, 1, 0
        %v444 = vsel %vm388, 1, 0
        %v445 = vsel %vm389, 1, 0
        %v446 = vsel %vm390, 1, 0
        %v447 = vsel %vm391, 1, 0
        %v448 = vsel %vm392, 1, 0
        %v449 = vsel %vm393, 1, 0
        %v450 = vsel %vm394, 1, 0
        %v451 = vsel %vm395, 1, 0
        %v452 = vsel %vm396, 1, 0
        %v453 = vsel %vm397, 1, 0
        %v454 = vsel %vm398, 1, 0
        %v455 = vsel %vm399, 1, 0
        %v456 = vsel %vm400, 1, 0
        %v457 = vsel %vm401, 1, 0
        %v458 = vsel %vm402, 1, 0
        %v459 = vsel %vm403, 1, 0
        %v460 = vsel %vm404, 1, 0
        %v461 = vsel %vm405, 1, 0
        %v462 = vsel %vm406, 1, 0
        %v463 = vsel %vm407, 1, 0
        %v464 = vsel %vm408, 1, 0
        %v465 = vsel %vm409, 1, 0
        %v466 = vsel %vm410, 1, 0
        %v467 = vsel %vm411, 1, 0
        %v468 = vsel %vm412, 1, 0
        %v469 = vsel %vm413, 1, 0
        %v470 = vsel %vm414, 1, 0
        %v471 = vsel %vm415, 1, 0
        %v472 = vsel %vm416, 1, 0
        %v473 = vsel %vm417, 1, 0
        %v474 = vsel %vm418, 1, 0
        %v475 = vsel %vm419, 1, 0
        %v476 = vsel %vm420, 1, 0
        %v477 = vsel %vm421, 1, 0
        %v478 = vsel %vm422, 1, 0
        %v479 = vsel %vm423, 1, 0
        %v480 = vsel %vm424, 1, 0
        %v481 = vsel %vm425, 1, 0
        %v482 = vsel %vm426, 1, 0
        %v483 = vsel %vm427, 1, 0
        %v484 = vsel %vm428, 1, 0
        %v485 = vsel %vm429, 1, 0
        %v486 = vsel %vm430, 1, 0
        %v487 = vcvt.s32.f32 %v431
        %v488 = vcvt.s32.f32 %v432
        %v489 = vcvt.s32.f32 %v433
        %v490 = vcvt.s32.f32 %v434
        %v491 = vcvt.s32.f32 %v435
        %v492 = vcvt.s32.f32 %v436
        %v493 = vcvt.s32.f32 %v437
        %v494 = vcvt.s32.f32 %v438
        %v495 = vcvt.s32.f32 %v439
        %v496 = vcvt.s32.f32 %v440
        %v497 = vcvt.s32.f32 %v441
        %v498 = vcvt.s32.f32 %v442
        %v499 = vcvt.s32.f32 %v443
        %v500 = vcvt.s32.f32 %v444
        %v501 = vcvt.s32.f32 %v445
        %v502 = vcvt.s32.f32 %v446
        %v503 = vcvt.s32.f32 %v447
        %v504 = vcvt.s32.f32 %v448
        %v505 = vcvt.s32.f32 %v449
        %v506 = vcvt.s32.f32 %v450
        %v507 = vcvt.s32.f32 %v451
        %v508 = vcvt.s32.f32 %v452
        %v509 = vcvt.s32.f32 %v453
        %v510 = vcvt.s32.f32 %v454
        %v511 = vcvt.s32.f32 %v455
        %v512 = vcvt.s32.f32 %v456
        %v513 = vcvt.s32.f32 %v457
        %v514 = vcvt.s32.f32 %v458
        %v515 = vcvt.s32.f32 %v459
        %v516 = vcvt.s32.f32 %v460
        %v517 = vcvt.s32.f32 %v461
        %v518 = vcvt.s32.f32 %v462
        %v519 = vcvt.s32.f32 %v463
        %v520 = vcvt.s32.f32 %v464
        %v521 = vcvt.s32.f32 %v465
        %v522 = vcvt.s32.f32 %v466
        %v523 = vcvt.s32.f32 %v467
        %v524 = vcvt.s32.f32 %v468
        %v525 = vcvt.s32.f32 %v469
        %v526 = vcvt.s32.f32 %v470
        %v527 = vcvt.s32.f32 %v471
        %v528 = vcvt.s32.f32 %v472
        %v529 = vcvt.s32.f32 %v473
        %v530 = vcvt.s32.f32 %v474
        %v531 = vcvt.s32.f32 %v475
        %v532 = vcvt.s32.f32 %v476
        %v533 = vcvt.s32.f32 %v477
        %v534 = vcvt.s32.f32 %v478
        %v535 = vcvt.s32.f32 %v479
        %v536 = vcvt.s32.f32 %v480
        %v537 = vcvt.s32.f32 %v481
        %v538 = vcvt.s32.f32 %v482
        %v539 = vcvt.s32.f32 %v483
        %v540 = vcvt.s32.f32 %v484
        %v541 = vcvt.s32.f32 %v485
        %v542 = vcvt.s32.f32 %v486
        %v543 = vld [vmem:[%s2] sm:$0xff]
        %v544 = vld [vmem:[%s2 + $0x8] sm:$0xff]
        %vm545 = vcmask 916480
        %v547 = vsel %vm545, %v543, 0
        %v550 = vsel %vm545, %v544, 0
        %552 = vmatprep.subr.mxu0 %v488
        %553 = vmatpush1.msra.mxu0 %v487
        %554 = vmatprep.subr.mxu0 %v492
        %555 = vmatpush1.msra.mxu0 %v491
        %556 = vmatprep.subr.mxu0 %v496
        %557 = vmatpush1.msra.mxu0 %v495
        %558 = vmatprep.subr.mxu0 %v500
        %559 = vmatpush1.msra.mxu0 %v499
        %560 = vmatprep.subr.mxu0 %v504
        %561 = vmatpush1.msra.mxu0 %v503
        %562 = vmatprep.subr.mxu0 %v508
        %563 = vmatpush1.msra.mxu0 %v507
        %564 = vmatprep.subr.mxu0 %v512
        %565 = vmatpush1.msra.mxu0 %v511
        %566 = vmatprep.subr.mxu0 %v516
        %567 = vmatpush1.msra.mxu0 %v515
        %568 = vmatprep.subr.mxu0 %v520
        %569 = vmatpush1.msra.mxu0 %v519
        %570 = vmatprep.subr.mxu0 %v524
        %571 = vmatpush1.msra.mxu0 %v523
        %572 = vmatprep.subr.mxu0 %v528
        %573 = vmatpush1.msra.mxu0 %v527
        %574 = vmatprep.subr.mxu0 %v532
        %575 = vmatpush1.msra.mxu0 %v531
        %576 = vmatprep.subr.mxu0 %v536
        %577 = vmatpush1.msra.mxu0 %v535
        %578 = vmatprep.subr.mxu0 %v540
        %579 = vmatpush1.msra.mxu0 %v539
        %580 = vmatprep.subr.mxu0 0.0
        %581 = vmatpush1.msra.mxu0 0.0
        %582 = vmatprep.subr.mxu0 0.0
        %583 = vmatpush1.msra.mxu0 0.0
        %584 = vmatprep.subr.mxu0 0.0
        %585 = vmatpush1.msra.mxu0 0.0
        %586 = vmatprep.subr.mxu0 0.0
        %587 = vmatpush1.msra.mxu0 0.0
        %588 = vmatprep.subr.mxu0 0.0
        %589 = vmatpush1.msra.mxu0 0.0
        %590 = vmatprep.subr.mxu0 0.0
        %591 = vmatpush1.msra.mxu0 0.0
        %592 = vmatprep.subr.mxu0 0.0
        %593 = vmatpush1.msra.mxu0 0.0
        %594 = vmatprep.subr.mxu0 0.0
        %595 = vmatpush1.msra.mxu0 0.0
        %596 = vmatprep.subr.mxu0 0.0
        %597 = vmatpush1.msra.mxu0 0.0
        %598 = vmatprep.subr.mxu0 0.0
        %599 = vmatpush1.msra.mxu0 0.0
        %600 = vmatprep.subr.mxu0 0.0
        %601 = vmatpush1.msra.mxu0 0.0
        %602 = vmatprep.subr.mxu0 0.0
        %603 = vmatpush1.msra.mxu0 0.0
        %604 = vmatprep.subr.mxu0 0.0
        %605 = vmatpush1.msra.mxu0 0.0
        %606 = vmatprep.subr.mxu0 0.0
        %607 = vmatpush1.msra.mxu0 0.0
        %608 = vmatprep.subr.mxu0 0.0
        %609 = vmatpush1.msra.mxu0 0.0
        %610 = vmatprep.subr.mxu0 0.0
        %611 = vmatpush1.msra.mxu0 0.0
        %612 = vmatprep.subr.mxu0 0.0
        %613 = vmatpush1.msra.mxu0 0.0
        %614 = vmatprep.subr.mxu0 0.0
        %615 = vmatpush1.msra.mxu0 0.0
        %616 = vmatprep.mubr.f32.mxu0 0.0
        %617 = vmatmul.mubr.f32.gmra.mrb[0].mxu0 %v547
        %v618 = vpop.f32.mrb[0].mxu0
        %v619 = vadd.f32 0.0, %v618
        %v620 = vpop.f32.mrb[0].mxu0
        %v621 = vadd.f32 0.0, %v620
        %622 = vmatprep.mubr.f32.mxu0 0.0
        %623 = vmatmul.mubr.f32.gmra.mrb[0].mxu0 %v550
        %v624 = vpop.f32.mrb[0].mxu0
        %v625 = vadd.f32 0.0, %v624
        %v626 = vpop.f32.mrb[0].mxu0
        %v627 = vadd.f32 0.0, %v626
        %628 = vdwg.mxu0
        %629 = vmatprep.subr.mxu0 %v490
        %630 = vmatpush1.msra.mxu0 %v489
        %631 = vmatprep.subr.mxu0 %v494
        %632 = vmatpush1.msra.mxu0 %v493
        %633 = vmatprep.subr.mxu0 %v498
        %634 = vmatpush1.msra.mxu0 %v497
        %635 = vmatprep.subr.mxu0 %v502
        %636 = vmatpush1.msra.mxu0 %v501
        %637 = vmatprep.subr.mxu0 %v506
        %638 = vmatpush1.msra.mxu0 %v505
        %639 = vmatprep.subr.mxu0 %v510
        %640 = vmatpush1.msra.mxu0 %v509
        %641 = vmatprep.subr.mxu0 %v514
        %642 = vmatpush1.msra.mxu0 %v513
        %643 = vmatprep.subr.mxu0 %v518
        %644 = vmatpush1.msra.mxu0 %v517
        %645 = vmatprep.subr.mxu0 %v522
        %646 = vmatpush1.msra.mxu0 %v521
        %647 = vmatprep.subr.mxu0 %v526
        %648 = vmatpush1.msra.mxu0 %v525
        %649 = vmatprep.subr.mxu0 %v530
        %650 = vmatpush1.msra.mxu0 %v529
        %651 = vmatprep.subr.mxu0 %v534
        %652 = vmatpush1.msra.mxu0 %v533
        %653 = vmatprep.subr.mxu0 %v538
        %654 = vmatpush1.msra.mxu0 %v537
        %655 = vmatprep.subr.mxu0 %v542
        %656 = vmatpush1.msra.mxu0 %v541
        %657 = vmatprep.subr.mxu0 0.0
        %658 = vmatpush1.msra.mxu0 0.0
        %659 = vmatprep.subr.mxu0 0.0
        %660 = vmatpush1.msra.mxu0 0.0
        %661 = vmatprep.subr.mxu0 0.0
        %662 = vmatpush1.msra.mxu0 0.0
        %663 = vmatprep.subr.mxu0 0.0
        %664 = vmatpush1.msra.mxu0 0.0
        %665 = vmatprep.subr.mxu0 0.0
        %666 = vmatpush1.msra.mxu0 0.0
        %667 = vmatprep.subr.mxu0 0.0
        %668 = vmatpush1.msra.mxu0 0.0
        %669 = vmatprep.subr.mxu0 0.0
        %670 = vmatpush1.msra.mxu0 0.0
        %671 = vmatprep.subr.mxu0 0.0
        %672 = vmatpush1.msra.mxu0 0.0
        %673 = vmatprep.subr.mxu0 0.0
        %674 = vmatpush1.msra.mxu0 0.0
        %675 = vmatprep.subr.mxu0 0.0
        %676 = vmatpush1.msra.mxu0 0.0
        %677 = vmatprep.subr.mxu0 0.0
        %678 = vmatpush1.msra.mxu0 0.0
        %679 = vmatprep.subr.mxu0 0.0
        %680 = vmatpush1.msra.mxu0 0.0
        %681 = vmatprep.subr.mxu0 0.0
        %682 = vmatpush1.msra.mxu0 0.0
        %683 = vmatprep.subr.mxu0 0.0
        %684 = vmatpush1.msra.mxu0 0.0
        %685 = vmatprep.subr.mxu0 0.0
        %686 = vmatpush1.msra.mxu0 0.0
        %687 = vmatprep.subr.mxu0 0.0
        %688 = vmatpush1.msra.mxu0 0.0
        %689 = vmatprep.subr.mxu0 0.0
        %690 = vmatpush1.msra.mxu0 0.0
        %691 = vmatprep.subr.mxu0 0.0
        %692 = vmatpush1.msra.mxu0 0.0
        %693 = vmatprep.mubr.f32.mxu0 0.0
        %694 = vmatmul.mubr.f32.gmra.mrb[0].mxu0 %v547
        %v695 = vpop.f32.mrb[0].mxu0
        %v696 = vadd.f32 0.0, %v695
        %v697 = vpop.f32.mrb[0].mxu0
        %v698 = vadd.f32 0.0, %v697
        %699 = vmatprep.mubr.f32.mxu0 0.0
        %700 = vmatmul.mubr.f32.gmra.mrb[0].mxu0 %v550
        %v701 = vpop.f32.mrb[0].mxu0
        %v702 = vadd.f32 0.0, %v701
        %v703 = vpop.f32.mrb[0].mxu0
        %v704 = vadd.f32 0.0, %v703
        %705 = vdwg.mxu0
        %v706 = vmul.f32 %v619, %v625
        %v707 = vmul.f32 %v621, %v627
        %v708 = vmul.f32 %v696, %v702
        %v709 = vmul.f32 %v698, %v704
        %v710 = vrot.slane %v706, 4
        %v711 = vadd.f32 %v706, %v710
        %v712 = vrot.slane %v711, 2
        %v713 = vadd.f32 %v711, %v712
        %v714 = vrot.slane %v713, 1
        %v715 = vadd.f32 %v713, %v714
        %v716 = vrot.slane %v707, 4
        %v717 = vadd.f32 %v707, %v716
        %v718 = vrot.slane %v717, 2
        %v719 = vadd.f32 %v717, %v718
        %v720 = vrot.slane %v719, 1
        %v721 = vadd.f32 %v719, %v720
        %v722 = vrot.slane %v708, 4
        %v723 = vadd.f32 %v708, %v722
        %v724 = vrot.slane %v723, 2
        %v725 = vadd.f32 %v723, %v724
        %v726 = vrot.slane %v725, 1
        %v727 = vadd.f32 %v725, %v726
        %v728 = vrot.slane %v709, 4
        %v729 = vadd.f32 %v709, %v728
        %v730 = vrot.slane %v729, 2
        %v731 = vadd.f32 %v729, %v730
        %v732 = vrot.slane %v731, 1
        %v733 = vadd.f32 %v731, %v732
        %v738 = vcombine.low %v715, %v721
        %v739 = vcombine.low %v727, %v733
        %v741 = vunpack.c.l.s4 1966171168
        %v742 = vunpack.c.0.s8 %v741
        %v743 = vlaneseq
        %v744 = vshrl.u32 %v743, 7
        %v745 = vsub.s32 %v742, %v744
        %v746 = vrot.slane %v738, %v745
        %v748 = vunpack.c.l.s4 1966171168
        %v749 = vunpack.c.0.s8 %v748
        %v750 = vlaneseq
        %v751 = vshrl.u32 %v750, 7
        %v752 = vsub.s32 %v749, %v751
        %v753 = vrot.slane %v739, %v752
        %v754 = vcombine.low %v746, %v753
        %v756 = vunpack.c.l.s4 1966171168
        %v757 = vunpack.c.0.s8 %v756
        %v758 = vlaneseq
        %v759 = vshrl.u32 %v758, 7
        %v760 = vsub.s32 %v757, %v759
        %v761 = vrot.slane %v754, %v760
        %v763 = vlaneseq
        %vm764 = vcmp.ge.s32.totalorder %v763, 0
        %vm765 = vcmp.lt.s32.totalorder %v763, 512
        %vm766 = vmand %vm764, %vm765
        %767 = vst.msk [vmem:[%s164] sm:$0xf] %vm766, %v761
        %s768 = sand.u32 %s93, 1
        %s769 = scalar_lea.sflag [#allocation3], %s768
        %s770 = sand.u32 %s93, 1
        %s771 = smul.addr %s770, 4
        %s772 = scalar_lea.vmem [#allocation2], %s771
        // Predicated region
        $region33: #{tpu_custom_call.1} parent=31 // pred_check
          %p773 = pneg %p103
        $region34: #{tpu_custom_call.1} parent=31 // pred_check_branch
          %775 = sbr.rel (%p773) target = $region36
        $region35: #{tpu_custom_call.1} parent=31 // pred_region
          %s776 = smul.u32 4, %s17
          %s778 = ssub.s32 64, 64
          %779 = vsyncadd %s769, %s778
          %s780 = smul.addr %s776, 16
          %s781 = scalar_lea.hbm %s3, %s780
          %s783 = sshll.u32 %s772, 4
          %s784 = int_to_ptr.vmem [resolvable:$true] %s783
          %786 = dma.vmem_to_hbm [thread:$0]  %s784, 64, %s781, %s769
        $region36: #{tpu_custom_call.1} parent=31 // pred_fallthru
          _
      $region32: #{tpu_custom_call.1} parent=5 // pred_fallthru
        _
      %p787 = scmp.le.s32.totalorder 2, %s12
      // Predicated region
      $region37: #{tpu_custom_call.1} parent=5 // pred_check
        %p788 = pneg %p787
      $region38: #{tpu_custom_call.1} parent=5 // pred_check_branch
        %790 = sbr.rel (%p788) target = $region40
      $region39: #{tpu_custom_call.1} parent=5 // pred_region
        %s791 = ssub.s32 %s12, 2
        // Predicated region
        $region41: #{tpu_custom_call.1} parent=39 // pred_check
          %p792 = pneg %p109
        $region42: #{tpu_custom_call.1} parent=39 // pred_check_branch
          %794 = sbr.rel (%p792) target = $region44
        $region43: #{tpu_custom_call.1} parent=39 // pred_region
          %s795 = sand.u32 %s94, 1
          %s796 = scalar_lea.sflag [#allocation3], %s795
          %s797 = sand.u32 %s94, 1
          %s798 = smul.addr %s797, 4
          %s799 = scalar_lea.vmem [#allocation2], %s798
          %800 = dma.done %s796, 64
        $region44: #{tpu_custom_call.1} parent=39 // pred_fallthru
          _
      $region40: #{tpu_custom_call.1} parent=5 // pred_fallthru
        _
    $region6: #{tpu_custom_call.1} parent=1 // loop_footer
      %s16 = sadd.s32 1, %s12
    $region7: #{tpu_custom_call.1} parent=1 // loop_footer_branch
      %11 = sbr.rel target = $region3
    $region8: #{tpu_custom_call.1} parent=1 // loop_exit
      _
    %801 = vsyncpa [#allocation3], 1
    %s802 = scalar_lea.sflag [#allocation3], 1
    %803 = vsyncpa %s802, 1

</llo_original>
